<compile_context>
chip_gen: v7x
topology: tpu7x:2x2x1
jax: 0.10.0
libtpu: 0.0.40
codegen_flags: <defaults>
</compile_context>

<pallas_src>
import functools
import math

import jax
import jax.numpy as jnp
import numpy as np
from jax.experimental import pallas as pl
from jax.experimental.pallas import tpu as pltpu


def _mha_fused_kernel(e_ref, wqv_ref, bqv_ref, o_ref, *, kh):
    """Single invocation computing every attention head at once.

    e_ref  : (N, D_in)      token embeddings
    wqv_ref: (D_in, 2*K*H)  [ scaled folded query/key weights | stacked value weights ]
    bqv_ref: (1, 2*K*H)     [ scaled folded query/key bias    | stacked value biases  ]
    o_ref  : (1, K*H)       concatenated head outputs (h_muti flattened)
    """
    e = e_ref[...]                                                     # (N, D_in)

    # One MXU pass produces both the (pre-scaled) attention scores and the
    # value projections; the split is on a 128-lane boundary, so it is free.
    proj = jnp.dot(e, wqv_ref[...], preferred_element_type=jnp.float32)
    proj = proj + bqv_ref[...]                                         # (N, 2*K*H)

    scores = proj[:, :kh]      # (N, K*H): q_k.(W_k e_i + b_k)/sqrt(H), replicated over h
    v = proj[:, kh:]           # (N, K*H): (W_v^(k) e_i + b_v^(k))[h]

    # Softmax over the N tokens (sublane axis), independently per lane/column.
    m = jnp.max(scores, axis=0, keepdims=True)                         # (1, K*H)
    p = jnp.exp(scores - m)                                            # (N, K*H)
    denom = jnp.sum(p, axis=0, keepdims=True)                          # (1, K*H)
    attn = p * pl.reciprocal(denom, approx=True)                       # (N, K*H)

    # h_muti[k*H + h] = sum_i attn_i^(k) * v_i^(k)[h]  -> one (1, 128) store.
    o_ref[...] = jnp.sum(attn * v, axis=0, keepdims=True).astype(o_ref.dtype)


def multi_head_attention(e, wk, bk, wv, bv, q):
    """e: (N, D_in); wk/wv: (K, H, D_in); bk/bv/q: (K, H). Returns (K, H)."""
    n_tokens, d_in = e.shape
    num_heads, hidden, _ = wk.shape
    kh = num_heads * hidden
    scale = 1.0 / math.sqrt(hidden)

    # ---- wrapper-side layout plumbing (tiny XLA ops, zero in-kernel transposes) ----
    # Fold learnable query into the key projection (exact):
    #   q . (W_k e + b_k) = (q W_k) . e + q . b_k
    wq_eff = jnp.einsum('kh,khd->kd', q, wk)                  # (K, D_in)
    qb_eff = jnp.einsum('kh,kh->k', q, bk)                    # (K,)

    # Head-expand along lanes so the kernel stays K*H (=128)-lane dense, and
    # fold the softmax scaling into the weights/bias.
    wq_exp = jnp.repeat(wq_eff, hidden, axis=0).T * scale     # (D_in, K*H)
    qb_exp = (jnp.repeat(qb_eff, hidden) * scale).reshape(1, kh)

    # Stack value projections: column k*H + h == W_v^(k)[h, :]
    wv_all = wv.reshape(kh, d_in).T                           # (D_in, K*H)
    bv_all = bv.reshape(1, kh)                                # (1, K*H)

    # Fuse both projections into a single matmul operand.
    wqv = jnp.concatenate([wq_exp, wv_all], axis=1)           # (D_in, 2*K*H)
    bqv = jnp.concatenate([qb_exp, bv_all], axis=1)           # (1, 2*K*H)

    vmem = pltpu.MemorySpace.VMEM
    out = pl.pallas_call(
        functools.partial(_mha_fused_kernel, kh=kh),
        out_shape=jax.ShapeDtypeStruct((1, kh), e.dtype),
        in_specs=[
            pl.BlockSpec(memory_space=vmem),   # e
            pl.BlockSpec(memory_space=vmem),   # wqv
            pl.BlockSpec(memory_space=vmem),   # bqv
        ],
        out_specs=pl.BlockSpec(memory_space=vmem),
    )(e, wqv, bqv)

    return out.reshape(num_heads, hidden)


def _reference(e, wk, bk, wv, bv, q):
    """Plain-JAX reference mirroring the PyTorch forward exactly."""
    outs = []
    for h in range(wk.shape[0]):
        k = e @ wk[h].T + bk[h]
        v = e @ wv[h].T + bv[h]
        qk = q[h] @ k.T
        attn = jax.nn.softmax(qk / math.sqrt(k.shape[-1]), axis=-1)
        outs.append(attn @ v)
    return jnp.stack(outs, axis=-2)


if __name__ == "__main__":
    # Small shapes consistent with the module's forward: e is (N, input_size).
    N_TOKENS = 16
    INPUT_SIZE = 32
    HIDDEN_SIZE = 32
    NUM_HEADS = 4          # NUM_HEADS * HIDDEN_SIZE = 128 -> one full lane group

    key = jax.random.PRNGKey(0)
    k_e, k_q, k_wk, k_bk, k_wv, k_bv = jax.random.split(key, 6)

    e = jax.random.normal(k_e, (N_TOKENS, INPUT_SIZE), dtype=jnp.float32)

    # Deterministic parameter init (shapes from SingleHeadAttention.__init__,
    # stacked over heads); Linear-style uniform bound 1/sqrt(fan_in).
    bound = 1.0 / math.sqrt(INPUT_SIZE)
    q_param = jax.random.normal(k_q, (NUM_HEADS, HIDDEN_SIZE), dtype=jnp.float32)
    wk = jax.random.uniform(k_wk, (NUM_HEADS, HIDDEN_SIZE, INPUT_SIZE),
                            minval=-bound, maxval=bound, dtype=jnp.float32)
    bk = jax.random.uniform(k_bk, (NUM_HEADS, HIDDEN_SIZE),
                            minval=-bound, maxval=bound, dtype=jnp.float32)
    wv = jax.random.uniform(k_wv, (NUM_HEADS, HIDDEN_SIZE, INPUT_SIZE),
                            minval=-bound, maxval=bound, dtype=jnp.float32)
    bv = jax.random.uniform(k_bv, (NUM_HEADS, HIDDEN_SIZE),
                            minval=-bound, maxval=bound, dtype=jnp.float32)

    out = multi_head_attention(e, wk, bk, wv, bv, q_param)
    out = jax.block_until_ready(out)

    ref = _reference(e, wk, bk, wv, bv, q_param)
    # Tolerance accommodates the EUP approximate reciprocal in the softmax
    # normalization; all other arithmetic is exactly equivalent to the
    # reference up to f32 rounding order.
    np.testing.assert_allclose(np.asarray(out), np.asarray(ref),
                               rtol=2e-3, atol=2e-3)

    print("KERNEL_OK")
</pallas_src>

<mosaic_0001>
module attributes {stable_mosaic.version = 11 : i64} {
  func.func @_mha_fused_kernel(%arg0: memref<16x32xf32, #tpu.memory_space<vmem>>, %arg1: memref<32x256xf32, #tpu.memory_space<vmem>>, %arg2: memref<1x256xf32, #tpu.memory_space<vmem>>, %arg3: memref<1x128xf32, #tpu.memory_space<vmem>>) attributes {dimension_semantics = [], scalar_prefetch = 0 : i64, scratch_operands = 0 : i64, tpu.core_type = #tpu.core_type<tc>} {
    %c0 = arith.constant 0 : index
    %c0_0 = arith.constant 0 : index
    %0 = vector.load %arg0[%c0, %c0_0] : memref<16x32xf32, #tpu.memory_space<vmem>>, vector<16x32xf32>
    %c0_1 = arith.constant 0 : index
    %c0_2 = arith.constant 0 : index
    %1 = vector.load %arg1[%c0_1, %c0_2] : memref<32x256xf32, #tpu.memory_space<vmem>>, vector<32x256xf32>
    %cst = arith.constant dense<0.000000e+00> : vector<16x256xf32>
    %2 = tpu.matmul %0, %1, %cst {dimension_numbers = #tpu.dot_dimension_numbers<[1], [0], [0], [1], [0, 0, 1, 1], [], []>} : vector<16x32xf32>, vector<32x256xf32>, vector<16x256xf32> -> vector<16x256xf32>
    %c0_3 = arith.constant 0 : index
    %c0_4 = arith.constant 0 : index
    %3 = vector.load %arg2[%c0_3, %c0_4] : memref<1x256xf32, #tpu.memory_space<vmem>>, vector<1x256xf32>
    %4 = vector.broadcast %3 : vector<1x256xf32> to vector<16x256xf32>
    %5 = arith.addf %2, %4 : vector<16x256xf32>
    %6 = vector.extract_strided_slice %5 {offsets = [0, 0], sizes = [16, 128], strides = [1, 1]} : vector<16x256xf32> to vector<16x128xf32>
    %7 = vector.extract_strided_slice %5 {offsets = [0, 128], sizes = [16, 128], strides = [1, 1]} : vector<16x256xf32> to vector<16x128xf32>
    %cst_5 = arith.constant dense<0xFF800000> : vector<128xf32>
    %8 = vector.multi_reduction <maximumf>, %6, %cst_5 [0] : vector<16x128xf32> to vector<128xf32>
    %9 = vector.shape_cast %8 : vector<128xf32> to vector<1x128xf32>
    %10 = vector.broadcast %9 : vector<1x128xf32> to vector<16x128xf32>
    %11 = arith.subf %6, %10 : vector<16x128xf32>
    %12 = math.exp %11 : vector<16x128xf32>
    %cst_6 = arith.constant dense<0.000000e+00> : vector<128xf32>
    %13 = vector.multi_reduction <add>, %12, %cst_6 [0] : vector<16x128xf32> to vector<128xf32>
    %14 = vector.shape_cast %13 : vector<128xf32> to vector<1x128xf32>
    %15 = tpu.reciprocal %14 {approx = true} : vector<1x128xf32> -> vector<1x128xf32>
    %16 = vector.broadcast %15 : vector<1x128xf32> to vector<16x128xf32>
    %17 = arith.mulf %12, %16 : vector<16x128xf32>
    %18 = arith.mulf %17, %7 : vector<16x128xf32>
    %cst_7 = arith.constant dense<0.000000e+00> : vector<128xf32>
    %19 = vector.multi_reduction <add>, %18, %cst_7 [0] : vector<16x128xf32> to vector<128xf32>
    %20 = vector.shape_cast %19 : vector<128xf32> to vector<1x128xf32>
    %c0_8 = arith.constant 0 : index
    %c0_9 = arith.constant 0 : index
    %21 = vector.load %arg3[%c0_8, %c0_9] : memref<1x128xf32, #tpu.memory_space<vmem>>, vector<1x128xf32>
    tpu.vector_store %arg3[%c0_8, %c0_9], %20 {strides = array<i32>} : memref<1x128xf32, #tpu.memory_space<vmem>>, vector<1x128xf32>,
    return
  }
}

</mosaic_0001>

<llo_original>
// kernel: tpu_custom_call.1
$region0: #{tpu_custom_call.1}
  #allocation0 [shape = 'u32[]', space=smem, size = 0x4, offset = 0x4, fixed_abs, tag = 'smem constant byte address 0x4 - core index']
  #allocation1 [shape = 'u32[144,128]{1,0:T(1,128)}', space=vmem, size = 0x12000, scoped, tag = 'internal scratch']
  %s0 = inlined_call_operand.hbm [shape: f32[16,32], index: 0, kind: input, shape index: {}]
  %s1 = inlined_call_operand.hbm [shape: f32[32,256], index: 1, kind: input, shape index: {}]
  %s2 = inlined_call_operand.vmem [shape: f32[1,256], index: 2, kind: input, shape index: {}]
  %s3 = inlined_call_operand.hbm [shape: f32[1,128], index: 3, kind: output, shape index: {}]
  %s4 = sld [smem:[#allocation0]]
  $region30: #{tpu_custom_call.1} parent=0
    _
  %s6 = ssub.s32 1, %s4
  %s7 = scalar_select 0, %s6, %s4
  $region1: #{tpu_custom_call.1} parent=0
    #allocation2 [shape = 'u8[8192]{0}', space=vmem, size = 0x2000, scoped, tag = 'input window, operand 0, single buffered']
    #allocation3 [shape = 's32[1]{0}', space=sflag, size = 0x4, scoped, tag = 'scoped memory for tpu_custom_call.1']
    #allocation4 [shape = 's32[1]{0}', space=sflag, size = 0x4, scoped, tag = 'scoped memory for tpu_custom_call.1']
    #allocation5 [shape = 'u8[32768]{0}', space=vmem, size = 0x8000, scoped, tag = 'input window, operand 1, single buffered']
    #allocation6 [shape = 's32[1]{0}', space=sflag, size = 0x4, scoped, tag = 'scoped memory for tpu_custom_call.1']
    #allocation7 [shape = 'u8[512]{0}', space=vmem, size = 0x400, scoped, tag = 'output window, operand 0, single buffered']
    %8 = vsyncpa [#allocation3], 0
    %9 = vsyncpa [#allocation6], 0
    %10 = vsyncpa [#allocation4], 0
    // Predicated region
    $region2: #{tpu_custom_call.1} parent=1 // pred_check
      _
    $region3: #{tpu_custom_call.1} parent=1 // pred_check_branch
      %12 = sbr.rel (0) target = $region5
    $region4: #{tpu_custom_call.1} parent=1 // pred_region
      %s14 = ssub.s32 256, 256
      %15 = vsyncadd [#allocation3], %s14
      %s16 = sshll.u32 [#allocation2], 4
      %s17 = int_to_ptr.vmem [resolvable:$true] %s16
      %22 = dma.hbm_to_vmem [thread:$0]  %s0, 256, %s17, [#allocation3], 128, 128, 8
    $region5: #{tpu_custom_call.1} parent=1 // pred_fallthru
      _
    // Predicated region
    $region6: #{tpu_custom_call.1} parent=1 // pred_check
      _
    $region7: #{tpu_custom_call.1} parent=1 // pred_check_branch
      %24 = sbr.rel (0) target = $region9
    $region8: #{tpu_custom_call.1} parent=1 // pred_region
      %s26 = ssub.s32 1024, 1024
      %27 = vsyncadd [#allocation6], %s26
      %s28 = sshll.u32 [#allocation5], 4
      %s29 = int_to_ptr.vmem [resolvable:$true] %s28
      %34 = dma.hbm_to_vmem [thread:$0]  %s1, 1024, %s29, [#allocation6], 256, 256, 16
    $region9: #{tpu_custom_call.1} parent=1 // pred_fallthru
      _
    // Predicated region
    $region10: #{tpu_custom_call.1} parent=1 // pred_check
      _
    $region11: #{tpu_custom_call.1} parent=1 // pred_check_branch
      %36 = sbr.rel (0) target = $region13
    $region12: #{tpu_custom_call.1} parent=1 // pred_region
      _
    $region13: #{tpu_custom_call.1} parent=1 // pred_fallthru
      _
    // Predicated region
    $region14: #{tpu_custom_call.1} parent=1 // pred_check
      _
    $region15: #{tpu_custom_call.1} parent=1 // pred_check_branch
      %38 = sbr.rel (0) target = $region17
    $region16: #{tpu_custom_call.1} parent=1 // pred_region
      %39 = dma.done [#allocation3], 256
    $region17: #{tpu_custom_call.1} parent=1 // pred_fallthru
      _
    // Predicated region
    $region18: #{tpu_custom_call.1} parent=1 // pred_check
      _
    $region19: #{tpu_custom_call.1} parent=1 // pred_check_branch
      %41 = sbr.rel (0) target = $region21
    $region20: #{tpu_custom_call.1} parent=1 // pred_region
      %42 = dma.done [#allocation6], 1024
    $region21: #{tpu_custom_call.1} parent=1 // pred_fallthru
      _
    %v43 = vld [vmem:[#allocation2] sm:$0xff]
    %v44 = vld [vmem:[#allocation2 + $0x8] sm:$0xff]
    %v45 = vld [vmem:[#allocation5] sm:$0xff]
    %v46 = vld [vmem:[#allocation5 + $0x8] sm:$0xff]
    %v47 = vld [vmem:[#allocation5 + $0x10] sm:$0xff]
    %v48 = vld [vmem:[#allocation5 + $0x18] sm:$0xff]
    %v49 = vld [vmem:[#allocation5 + $0x20] sm:$0xff]
    %v50 = vld [vmem:[#allocation5 + $0x28] sm:$0xff]
    %v51 = vld [vmem:[#allocation5 + $0x30] sm:$0xff]
    %v52 = vld [vmem:[#allocation5 + $0x38] sm:$0xff]
    %v53 = vld [vmem:[%s2] sm:$0x3]
    %v55 = vlaneseq
    %v56 = vshrl.u32 %v55, 7
    %v57 = vsub.s32 0, %v56
    %v58 = vrot.slane %v53, %v57
    %v59 = vlaneseq
    %v60 = vshrl.u32 %v59, 7
    %v61 = vsub.s32 1, %v60
    %v62 = vrot.slane %v53, %v61
    %vm65 = vcmask 261120
    %v67 = vsel %vm65, %v43, 0
    %v70 = vsel %vm65, %v44, 0
    %72 = vmatprep.subr.mxu0 %v46
    %73 = vmatpush1.msra.mxu0 %v45
    %74 = vmatprep.subr.mxu0 %v48
    %75 = vmatpush1.msra.mxu0 %v47
    %76 = vmatprep.subr.mxu0 %v50
    %77 = vmatpush1.msra.mxu0 %v49
    %78 = vmatprep.subr.mxu0 %v52
    %79 = vmatpush1.msra.mxu0 %v51
    %80 = vmatprep.subr.mxu0 0.0
    %81 = vmatpush1.msra.mxu0 0.0
    %82 = vmatprep.subr.mxu0 0.0
    %83 = vmatpush1.msra.mxu0 0.0
    %84 = vmatprep.subr.mxu0 0.0
    %85 = vmatpush1.msra.mxu0 0.0
    %86 = vmatprep.subr.mxu0 0.0
    %87 = vmatpush1.msra.mxu0 0.0
    %88 = vmatprep.subr.mxu0 0.0
    %89 = vmatpush1.msra.mxu0 0.0
    %90 = vmatprep.subr.mxu0 0.0
    %91 = vmatpush1.msra.mxu0 0.0
    %92 = vmatprep.subr.mxu0 0.0
    %93 = vmatpush1.msra.mxu0 0.0
    %94 = vmatprep.subr.mxu0 0.0
    %95 = vmatpush1.msra.mxu0 0.0
    %96 = vmatprep.subr.mxu0 0.0
    %97 = vmatpush1.msra.mxu0 0.0
    %98 = vmatprep.subr.mxu0 0.0
    %99 = vmatpush1.msra.mxu0 0.0
    %100 = vmatprep.subr.mxu0 0.0
    %101 = vmatpush1.msra.mxu0 0.0
    %102 = vmatprep.subr.mxu0 0.0
    %103 = vmatpush1.msra.mxu0 0.0
    %104 = vmatprep.subr.mxu0 0.0
    %105 = vmatpush1.msra.mxu0 0.0
    %106 = vmatprep.subr.mxu0 0.0
    %107 = vmatpush1.msra.mxu0 0.0
    %108 = vmatprep.subr.mxu0 0.0
    %109 = vmatpush1.msra.mxu0 0.0
    %110 = vmatprep.subr.mxu0 0.0
    %111 = vmatpush1.msra.mxu0 0.0
    %112 = vmatprep.subr.mxu0 0.0
    %113 = vmatpush1.msra.mxu0 0.0
    %114 = vmatprep.subr.mxu0 0.0
    %115 = vmatpush1.msra.mxu0 0.0
    %116 = vmatprep.subr.mxu0 0.0
    %117 = vmatpush1.msra.mxu0 0.0
    %118 = vmatprep.subr.mxu0 0.0
    %119 = vmatpush1.msra.mxu0 0.0
    %120 = vmatprep.subr.mxu0 0.0
    %121 = vmatpush1.msra.mxu0 0.0
    %122 = vmatprep.subr.mxu0 0.0
    %123 = vmatpush1.msra.mxu0 0.0
    %124 = vmatprep.subr.mxu0 0.0
    %125 = vmatpush1.msra.mxu0 0.0
    %126 = vmatprep.subr.mxu0 0.0
    %127 = vmatpush1.msra.mxu0 0.0
    %128 = vmatprep.subr.mxu0 0.0
    %129 = vmatpush1.msra.mxu0 0.0
    %130 = vmatprep.subr.mxu0 0.0
    %131 = vmatpush1.msra.mxu0 0.0
    %132 = vmatprep.subr.mxu0 0.0
    %133 = vmatpush1.msra.mxu0 0.0
    %134 = vmatprep.subr.mxu0 0.0
    %135 = vmatpush1.msra.mxu0 0.0
    %136 = vmatprep.mubr.f32.mxu0 0.0
    %137 = vmatmul.mubr.f32.gmra.mrb[0].mxu0 %v67
    %v138 = vpop.f32.mrb[0].mxu0
    %v139 = vadd.f32 %v58, %v138
    %v140 = vpop.f32.mrb[0].mxu0
    %v141 = vadd.f32 %v62, %v140
    %142 = vmatprep.mubr.f32.mxu0 0.0
    %143 = vmatmul.mubr.f32.gmra.mrb[0].mxu0 %v70
    %v144 = vpop.f32.mrb[0].mxu0
    %v145 = vadd.f32 %v58, %v144
    %v146 = vpop.f32.mrb[0].mxu0
    %v147 = vadd.f32 %v62, %v146
    %148 = vdwg.mxu0
    %v149 = vmax.f32 %v139, %v145
    %v150 = vrot.slane %v149, 4
    %v151 = vmax.f32 %v149, %v150
    %v152 = vrot.slane %v151, 2
    %v153 = vmax.f32 %v151, %v152
    %v154 = vrot.slane %v153, 1
    %v155 = vmax.f32 %v153, %v154
    %v156 = vsub.f32 %v139, %v155
    %v157 = vsub.f32 %v145, %v155
    %v158 = vmul.f32 %v156, 1.442695
    %v159 = vpow.pop %v158
    %v160 = vmul.f32 %v157, 1.442695
    %v161 = vpow.pop %v160
    %v162 = vadd.f32 %v159, %v161
    %v163 = vrot.slane %v162, 4
    %v164 = vadd.f32 %v162, %v163
    %v165 = vrot.slane %v164, 2
    %v166 = vadd.f32 %v164, %v165
    %v167 = vrot.slane %v166, 1
    %v168 = vadd.f32 %v166, %v167
    %v169 = vrcp.pop %v168
    %v170 = vmul.f32 %v159, %v169
    %v171 = vmul.f32 %v161, %v169
    %v172 = vmul.f32 %v170, %v141
    %v173 = vmul.f32 %v171, %v147
    %v174 = vadd.f32 %v172, %v173
    %v175 = vrot.slane %v174, 4
    %v176 = vadd.f32 %v174, %v175
    %v177 = vrot.slane %v176, 2
    %v178 = vadd.f32 %v176, %v177
    %v179 = vrot.slane %v178, 1
    %v180 = vadd.f32 %v178, %v179
    %181 = vst [vmem:[#allocation7] sm:$0x1] %v180
    // Predicated region
    $region22: #{tpu_custom_call.1} parent=1 // pred_check
      _
    $region23: #{tpu_custom_call.1} parent=1 // pred_check_branch
      %183 = sbr.rel (0) target = $region25
    $region24: #{tpu_custom_call.1} parent=1 // pred_region
      %s185 = ssub.s32 16, 16
      %186 = vsyncadd [#allocation4], %s185
      %s188 = sshll.u32 [#allocation7], 4
      %s189 = int_to_ptr.vmem [resolvable:$true] %s188
      %191 = dma.vmem_to_hbm [thread:$0]  %s189, 16, %s3, [#allocation4]
    $region25: #{tpu_custom_call.1} parent=1 // pred_fallthru
      _
    // Predicated region
    $region26: #{tpu_custom_call.1} parent=1 // pred_check
      _
    $region27: #{tpu_custom_call.1} parent=1 // pred_check_branch
      %193 = sbr.rel (0) target = $region29
    $region28: #{tpu_custom_call.1} parent=1 // pred_region
      %194 = dma.done [#allocation4], 16
    $region29: #{tpu_custom_call.1} parent=1 // pred_fallthru
      _
    %195 = vsyncpa [#allocation3], 1
    %196 = vsyncpa [#allocation6], 1
    %197 = vsyncpa [#allocation4], 1

</llo_original>
